<compile_context>
chip_gen: v7x
topology: tpu7x:2x2x1
jax: 0.10.0
libtpu: 0.0.40
codegen_flags: <defaults>
</compile_context>

<pallas_src>
import functools

import jax
import jax.numpy as jnp
from jax.experimental import pallas as pl
from jax.experimental.pallas import tpu as pltpu


def _round_up(v, m):
    return ((v + m - 1) // m) * m


def implicit_func_kernel(z_ref, x_ref, wt_ref, w_ref, nf_ref,
                         row_sub_ref, col_sub_ref, row_lane_ref, col_lane_ref,
                         out_ref,
                         wzux_sc, acc_sc,
                         *, alpha, edge_block):
    step = pl.program_id(0)
    n_pad = acc_sc.shape[0]

    # ---- First edge block: node-level matmul + accumulator init ----------------------
    @pl.when(step == 0)
    def _init():
        # WzUx = W(z + degree * x), degree == 1.0 (rescale=False, double_linear=False)
        zx = z_ref[...] + x_ref[...]
        wzux = jnp.dot(zx, wt_ref[...], preferred_element_type=jnp.float32)  # (z+x) @ W^T
        wzux_sc[...] = nf_ref[...] * wzux                                    # norm_factor * WzUx
        acc_sc[...] = jnp.zeros_like(acc_sc)

    # ---- Gather: msg[e] = tanh(WzUx[row[e]] - WzUx[col[e]]) via selection matmul ------
    # sel[e, n] = [row[e]==n] - [col[e]==n]  -> [edge_block, N_pad]  (nodes on lanes)
    node_lane = jax.lax.broadcasted_iota(jnp.int32, (edge_block, n_pad), 1)
    sel = ((row_sub_ref[...] == node_lane).astype(jnp.float32) -
           (col_sub_ref[...] == node_lane).astype(jnp.float32))
    msg = jnp.tanh(jnp.dot(sel, wzux_sc[...], preferred_element_type=jnp.float32))

    # ---- Scatter-add: acc[n] += sum_e inc[n,e] * msg[e] via incidence matmul ----------
    # inc[n, e] = [row[e]==n] - [col[e]==n]  -> [N_pad, edge_block]  (edges on lanes)
    node_sub = jax.lax.broadcasted_iota(jnp.int32, (n_pad, edge_block), 0)
    inc = ((row_lane_ref[...] == node_sub).astype(jnp.float32) -
           (col_lane_ref[...] == node_sub).astype(jnp.float32))
    acc_sc[...] += jnp.dot(inc, msg, preferred_element_type=jnp.float32)

    # ---- Last edge block: norm_factor scale, -(. @ W), residual blend -----------------
    @pl.when(step == pl.num_programs(0) - 1)
    def _finalize():
        new_z = nf_ref[...] * acc_sc[...]
        new_z = -jnp.dot(new_z, w_ref[...], preferred_element_type=jnp.float32)
        out_ref[...] = alpha * new_z + (1.0 - alpha) * z_ref[...]


def implicit_func(z, x, w, edge_index, norm_factor, *, alpha, edge_block=128):
    """z, x: [N, H] f32; w: [H, H] f32 (W.weight); edge_index: [2, E] i32;
    norm_factor: [N, 1] f32."""
    n, h = z.shape
    e = edge_index.shape[1]

    n_pad = _round_up(max(n, 8), 8)
    h_pad = _round_up(h, 128)
    e_pad = _round_up(e, edge_block)

    def pad2(a, rr, cc):
        return jnp.pad(a, ((0, rr - a.shape[0]), (0, cc - a.shape[1])))

    zp = pad2(z.astype(jnp.float32), n_pad, h_pad)
    xp = pad2(x.astype(jnp.float32), n_pad, h_pad)
    wp = pad2(w.astype(jnp.float32), h_pad, h_pad)   # W   (for new_z @ W)
    wtp = jnp.transpose(wp)                          # W^T (for (z+x) @ W^T)
    nfp = pad2(norm_factor.astype(jnp.float32), n_pad, 1)

    row = edge_index[0].astype(jnp.int32)
    col = edge_index[1].astype(jnp.int32)
    # Padded edges use node 0 on BOTH endpoints -> zero message and zero net incidence.
    row_p = jnp.pad(row, (0, e_pad - e))
    col_p = jnp.pad(col, (0, e_pad - e))
    row_sub = row_p.reshape(e_pad, 1)    # sublane-major (edges on sublanes)
    col_sub = col_p.reshape(e_pad, 1)
    row_lane = row_p.reshape(1, e_pad)   # lane-major (edges on lanes)
    col_lane = col_p.reshape(1, e_pad)

    grid = (e_pad // edge_block,)
    kernel = functools.partial(implicit_func_kernel, alpha=float(alpha),
                               edge_block=edge_block)

    flops = (4 * n_pad * h_pad * h_pad           # (z+x) @ W^T  and  new_z @ W
             + 4 * e_pad * n_pad * h_pad         # gather + scatter incidence matmuls
             + 6 * n_pad * h_pad + 2 * e_pad * n_pad)
    transcendentals = e_pad * h_pad              # tanh
    bytes_accessed = 4 * (3 * n_pad * h_pad + 2 * h_pad * h_pad + n_pad + 4 * e_pad)

    out = pl.pallas_call(
        kernel,
        out_shape=jax.ShapeDtypeStruct((n_pad, h_pad), jnp.float32),
        grid_spec=pltpu.PrefetchScalarGridSpec(
            num_scalar_prefetch=0,
            grid=grid,
            in_specs=[
                pl.BlockSpec((n_pad, h_pad), lambda i: (0, 0)),     # z
                pl.BlockSpec((n_pad, h_pad), lambda i: (0, 0)),     # x
                pl.BlockSpec((h_pad, h_pad), lambda i: (0, 0)),     # W^T
                pl.BlockSpec((h_pad, h_pad), lambda i: (0, 0)),     # W
                pl.BlockSpec((n_pad, 1), lambda i: (0, 0)),         # norm_factor
                pl.BlockSpec((edge_block, 1), lambda i: (i, 0)),    # row (sublane-major)
                pl.BlockSpec((edge_block, 1), lambda i: (i, 0)),    # col (sublane-major)
                pl.BlockSpec((1, edge_block), lambda i: (0, i)),    # row (lane-major)
                pl.BlockSpec((1, edge_block), lambda i: (0, i)),    # col (lane-major)
            ],
            out_specs=pl.BlockSpec((n_pad, h_pad), lambda i: (0, 0)),
            scratch_shapes=[
                pltpu.VMEM((n_pad, h_pad), jnp.float32),    # WzUx (resident across blocks)
                pltpu.VMEM((n_pad, h_pad), jnp.float32),    # scatter accumulator
            ],
        ),
        compiler_params=pltpu.CompilerParams(
            dimension_semantics=("arbitrary",)),             # edge axis accumulates
        cost_estimate=pl.CostEstimate(flops=flops,
                                      transcendentals=transcendentals,
                                      bytes_accessed=bytes_accessed),
    )(zp, xp, wtp, wp, nfp, row_sub, col_sub, row_lane, col_lane)

    return out[:n, :h]


def implicit_func_reference(z, x, w, edge_index, norm_factor, *, alpha):
    """Pure-JAX reference mirroring the PyTorch forward (full f32 matmuls)."""
    hp = jax.lax.Precision.HIGHEST
    row = edge_index[0]
    col = edge_index[1]
    wzux = jnp.dot(z + x, w.T, precision=hp)
    wzux = norm_factor * wzux
    msg = jnp.tanh(wzux[row] - wzux[col])
    agg = (jnp.zeros_like(z).at[row].add(msg * norm_factor[row])
           - jnp.zeros_like(z).at[col].add(msg * norm_factor[col]))
    new_z = -jnp.dot(agg, w, precision=hp)
    return alpha * new_z + (1.0 - alpha) * z


if __name__ == "__main__":
    key = jax.random.PRNGKey(0)
    k_z, k_x, k_w, k_e, k_nf = jax.random.split(key, 5)

    N = 16          # num nodes
    H = 32          # hidden_channel (= middle_channel)
    E = 300         # num edges  (-> 3 edge blocks of 128 after padding)
    ALPHA = 0.5

    z = jax.random.normal(k_z, (N, H), dtype=jnp.float32)
    x = jax.random.normal(k_x, (N, H), dtype=jnp.float32)
    # nn.Linear(hidden, hidden, bias=False) weight, deterministic init
    w = jax.random.normal(k_w, (H, H), dtype=jnp.float32) * (1.0 / jnp.sqrt(H))
    edge_index = jax.random.randint(k_e, (2, E), 0, N, dtype=jnp.int32)
    norm_factor = jax.random.uniform(k_nf, (N, 1), dtype=jnp.float32,
                                     minval=0.5, maxval=1.5)

    out = implicit_func(z, x, w, edge_index, norm_factor, alpha=ALPHA)
    out = jax.block_until_ready(out)

    ref = implicit_func_reference(z, x, w, edge_index, norm_factor, alpha=ALPHA)
    assert out.shape == (N, H) and out.dtype == jnp.float32
    max_diff = float(jnp.max(jnp.abs(out - ref)))
    assert jnp.allclose(out, ref, atol=2e-3, rtol=2e-3), (
        f"mismatch vs reference: max abs diff = {max_diff}")

    print("KERNEL_OK")
</pallas_src>

<mosaic_0001>
module attributes {stable_mosaic.version = 11 : i64} {
  func.func @implicit_func_kernel(%arg0: i32, %arg1: memref<16x128xf32, #tpu.memory_space<vmem>>, %arg2: memref<16x128xf32, #tpu.memory_space<vmem>>, %arg3: memref<128x128xf32, #tpu.memory_space<vmem>>, %arg4: memref<128x128xf32, #tpu.memory_space<vmem>>, %arg5: memref<16x1xf32, #tpu.memory_space<vmem>>, %arg6: memref<128x1xi32, #tpu.memory_space<vmem>>, %arg7: memref<128x1xi32, #tpu.memory_space<vmem>>, %arg8: memref<1x128xi32, #tpu.memory_space<vmem>>, %arg9: memref<1x128xi32, #tpu.memory_space<vmem>>, %arg10: memref<16x128xf32, #tpu.memory_space<vmem>>, %arg11: memref<16x128xf32, #tpu.memory_space<vmem>>, %arg12: memref<16x128xf32, #tpu.memory_space<vmem>>) attributes {dimension_semantics = [#tpu.dimension_semantics<arbitrary>], iteration_bounds = array<i64: 3>, scalar_prefetch = 0 : i64, scratch_operands = 2 : i64, tpu.core_type = #tpu.core_type<tc>, window_params = [{pipeline_mode = #tpu.pipeline_mode<synchronous>, transform_indices = @transform_0, window_bounds = array<i64: 16, 128>}, {pipeline_mode = #tpu.pipeline_mode<synchronous>, transform_indices = @transform_1, window_bounds = array<i64: 16, 128>}, {pipeline_mode = #tpu.pipeline_mode<synchronous>, transform_indices = @transform_2, window_bounds = array<i64: 128, 128>}, {pipeline_mode = #tpu.pipeline_mode<synchronous>, transform_indices = @transform_3, window_bounds = array<i64: 128, 128>}, {pipeline_mode = #tpu.pipeline_mode<synchronous>, transform_indices = @transform_4, window_bounds = array<i64: 16, 1>}, {transform_indices = @transform_5, window_bounds = array<i64: 128, 1>}, {transform_indices = @transform_6, window_bounds = array<i64: 128, 1>}, {transform_indices = @transform_7, window_bounds = array<i64: 1, 128>}, {transform_indices = @transform_8, window_bounds = array<i64: 1, 128>}, {pipeline_mode = #tpu.pipeline_mode<synchronous>, transform_indices = @transform_9, window_bounds = array<i64: 16, 128>}]} {
    %c0_i32 = arith.constant 0 : i32
    %0 = arith.cmpi eq, %arg0, %c0_i32 : i32
    %1 = arith.extui %0 : i1 to i32
    %c0_i32_0 = arith.constant 0 : i32
    %2 = arith.cmpi ne, %1, %c0_i32_0 : i32
    scf.if %2 {
      %c0_16 = arith.constant 0 : index
      %c0_17 = arith.constant 0 : index
      %37 = vector.load %arg1[%c0_16, %c0_17] : memref<16x128xf32, #tpu.memory_space<vmem>>, vector<16x128xf32>
      %c0_18 = arith.constant 0 : index
      %c0_19 = arith.constant 0 : index
      %38 = vector.load %arg2[%c0_18, %c0_19] : memref<16x128xf32, #tpu.memory_space<vmem>>, vector<16x128xf32>
      %39 = arith.addf %37, %38 : vector<16x128xf32>
      %c0_20 = arith.constant 0 : index
      %c0_21 = arith.constant 0 : index
      %40 = vector.load %arg3[%c0_20, %c0_21] : memref<128x128xf32, #tpu.memory_space<vmem>>, vector<128x128xf32>
      %cst_22 = arith.constant dense<0.000000e+00> : vector<16x128xf32>
      %41 = tpu.matmul %39, %40, %cst_22 {dimension_numbers = #tpu.dot_dimension_numbers<[1], [0], [0], [1], [0, 0, 1, 1], [], []>} : vector<16x128xf32>, vector<128x128xf32>, vector<16x128xf32> -> vector<16x128xf32>
      %c0_23 = arith.constant 0 : index
      %c0_24 = arith.constant 0 : index
      %42 = vector.load %arg5[%c0_23, %c0_24] : memref<16x1xf32, #tpu.memory_space<vmem>>, vector<16x1xf32>
      %43 = vector.broadcast %42 : vector<16x1xf32> to vector<16x128xf32>
      %44 = arith.mulf %43, %41 : vector<16x128xf32>
      %c0_25 = arith.constant 0 : index
      %c0_26 = arith.constant 0 : index
      %45 = vector.load %arg11[%c0_25, %c0_26] : memref<16x128xf32, #tpu.memory_space<vmem>>, vector<16x128xf32>
      tpu.vector_store %arg11[%c0_25, %c0_26], %44 {strides = array<i32>} : memref<16x128xf32, #tpu.memory_space<vmem>>, vector<16x128xf32>,
      %cst_27 = arith.constant 0.000000e+00 : f32
      %46 = vector.broadcast %cst_27 : f32 to vector<16x128xf32>
      %c0_28 = arith.constant 0 : index
      %c0_29 = arith.constant 0 : index
      %47 = vector.load %arg12[%c0_28, %c0_29] : memref<16x128xf32, #tpu.memory_space<vmem>>, vector<16x128xf32>
      tpu.vector_store %arg12[%c0_28, %c0_29], %46 {strides = array<i32>} : memref<16x128xf32, #tpu.memory_space<vmem>>, vector<16x128xf32>,
    } else {
    }
    %3 = tpu.iota {dimensions = array<i32: 1>} : vector<128x16xi32>
    %c0 = arith.constant 0 : index
    %c0_1 = arith.constant 0 : index
    %4 = vector.load %arg6[%c0, %c0_1] : memref<128x1xi32, #tpu.memory_space<vmem>>, vector<128x1xi32>
    %5 = vector.broadcast %4 : vector<128x1xi32> to vector<128x16xi32>
    %6 = arith.cmpi eq, %5, %3 : vector<128x16xi32>
    %7 = arith.extui %6 : vector<128x16xi1> to vector<128x16xi32>
    %8 = arith.sitofp %7 : vector<128x16xi32> to vector<128x16xf32>
    %c0_2 = arith.constant 0 : index
    %c0_3 = arith.constant 0 : index
    %9 = vector.load %arg7[%c0_2, %c0_3] : memref<128x1xi32, #tpu.memory_space<vmem>>, vector<128x1xi32>
    %10 = vector.broadcast %9 : vector<128x1xi32> to vector<128x16xi32>
    %11 = arith.cmpi eq, %10, %3 : vector<128x16xi32>
    %12 = arith.extui %11 : vector<128x16xi1> to vector<128x16xi32>
    %13 = arith.sitofp %12 : vector<128x16xi32> to vector<128x16xf32>
    %14 = arith.subf %8, %13 : vector<128x16xf32>
    %c0_4 = arith.constant 0 : index
    %c0_5 = arith.constant 0 : index
    %15 = vector.load %arg11[%c0_4, %c0_5] : memref<16x128xf32, #tpu.memory_space<vmem>>, vector<16x128xf32>
    %cst = arith.constant dense<0.000000e+00> : vector<128x128xf32>
    %16 = tpu.matmul %14, %15, %cst {dimension_numbers = #tpu.dot_dimension_numbers<[1], [0], [0], [1], [0, 0, 1, 1], [], []>} : vector<128x16xf32>, vector<16x128xf32>, vector<128x128xf32> -> vector<128x128xf32>
    %17 = math.tanh %16 : vector<128x128xf32>
    %18 = tpu.iota {dimensions = array<i32: 0>} : vector<16x128xi32>
    %c0_6 = arith.constant 0 : index
    %c0_7 = arith.constant 0 : index
    %19 = vector.load %arg8[%c0_6, %c0_7] : memref<1x128xi32, #tpu.memory_space<vmem>>, vector<1x128xi32>
    %20 = vector.broadcast %19 : vector<1x128xi32> to vector<16x128xi32>
    %21 = arith.cmpi eq, %20, %18 : vector<16x128xi32>
    %22 = arith.extui %21 : vector<16x128xi1> to vector<16x128xi32>
    %23 = arith.sitofp %22 : vector<16x128xi32> to vector<16x128xf32>
    %c0_8 = arith.constant 0 : index
    %c0_9 = arith.constant 0 : index
    %24 = vector.load %arg9[%c0_8, %c0_9] : memref<1x128xi32, #tpu.memory_space<vmem>>, vector<1x128xi32>
    %25 = vector.broadcast %24 : vector<1x128xi32> to vector<16x128xi32>
    %26 = arith.cmpi eq, %25, %18 : vector<16x128xi32>
    %27 = arith.extui %26 : vector<16x128xi1> to vector<16x128xi32>
    %28 = arith.sitofp %27 : vector<16x128xi32> to vector<16x128xf32>
    %29 = arith.subf %23, %28 : vector<16x128xf32>
    %c0_10 = arith.constant 0 : index
    %c0_11 = arith.constant 0 : index
    %30 = vector.load %arg12[%c0_10, %c0_11] : memref<16x128xf32, #tpu.memory_space<vmem>>, vector<16x128xf32>
    %cst_12 = arith.constant dense<0.000000e+00> : vector<16x128xf32>
    %31 = tpu.matmul %29, %17, %cst_12 {dimension_numbers = #tpu.dot_dimension_numbers<[1], [0], [0], [1], [0, 0, 1, 1], [], []>} : vector<16x128xf32>, vector<128x128xf32>, vector<16x128xf32> -> vector<16x128xf32>
    %32 = arith.addf %30, %31 : vector<16x128xf32>
    %c0_13 = arith.constant 0 : index
    %c0_14 = arith.constant 0 : index
    %33 = vector.load %arg12[%c0_13, %c0_14] : memref<16x128xf32, #tpu.memory_space<vmem>>, vector<16x128xf32>
    tpu.vector_store %arg12[%c0_13, %c0_14], %32 {strides = array<i32>} : memref<16x128xf32, #tpu.memory_space<vmem>>, vector<16x128xf32>,
    %c2_i32 = arith.constant 2 : i32
    %34 = arith.cmpi eq, %arg0, %c2_i32 : i32
    %35 = arith.extui %34 : i1 to i32
    %c0_i32_15 = arith.constant 0 : i32
    %36 = arith.cmpi ne, %35, %c0_i32_15 : i32
    scf.if %36 {
      %c0_16 = arith.constant 0 : index
      %c0_17 = arith.constant 0 : index
      %37 = vector.load %arg5[%c0_16, %c0_17] : memref<16x1xf32, #tpu.memory_space<vmem>>, vector<16x1xf32>
      %c0_18 = arith.constant 0 : index
      %c0_19 = arith.constant 0 : index
      %38 = vector.load %arg12[%c0_18, %c0_19] : memref<16x128xf32, #tpu.memory_space<vmem>>, vector<16x128xf32>
      %39 = vector.broadcast %37 : vector<16x1xf32> to vector<16x128xf32>
      %40 = arith.mulf %39, %38 : vector<16x128xf32>
      %c0_20 = arith.constant 0 : index
      %c0_21 = arith.constant 0 : index
      %41 = vector.load %arg4[%c0_20, %c0_21] : memref<128x128xf32, #tpu.memory_space<vmem>>, vector<128x128xf32>
      %cst_22 = arith.constant dense<0.000000e+00> : vector<16x128xf32>
      %42 = tpu.matmul %40, %41, %cst_22 {dimension_numbers = #tpu.dot_dimension_numbers<[1], [0], [0], [1], [0, 0, 1, 1], [], []>} : vector<16x128xf32>, vector<128x128xf32>, vector<16x128xf32> -> vector<16x128xf32>
      %cst_23 = arith.constant 0.000000e+00 : f32
      %43 = vector.broadcast %cst_23 : f32 to vector<16x128xf32>
      %44 = arith.subf %43, %42 : vector<16x128xf32>
      %cst_24 = arith.constant 5.000000e-01 : f32
      %45 = vector.broadcast %cst_24 : f32 to vector<16x128xf32>
      %46 = arith.mulf %45, %44 : vector<16x128xf32>
      %c0_25 = arith.constant 0 : index
      %c0_26 = arith.constant 0 : index
      %47 = vector.load %arg1[%c0_25, %c0_26] : memref<16x128xf32, #tpu.memory_space<vmem>>, vector<16x128xf32>
      %cst_27 = arith.constant 5.000000e-01 : f32
      %48 = vector.broadcast %cst_27 : f32 to vector<16x128xf32>
      %49 = arith.mulf %48, %47 : vector<16x128xf32>
      %50 = arith.addf %46, %49 : vector<16x128xf32>
      %c0_28 = arith.constant 0 : index
      %c0_29 = arith.constant 0 : index
      %51 = vector.load %arg10[%c0_28, %c0_29] : memref<16x128xf32, #tpu.memory_space<vmem>>, vector<16x128xf32>
      tpu.vector_store %arg10[%c0_28, %c0_29], %50 {strides = array<i32>} : memref<16x128xf32, #tpu.memory_space<vmem>>, vector<16x128xf32>,
    } else {
    }
    return
  }
  func.func @transform_0(%arg0: i32) -> (i32, i32) {
    %c0_i32 = arith.constant 0 : i32
    %c0_i32_0 = arith.constant 0 : i32
    %c0_i32_1 = arith.constant 0 : i32
    return %c0_i32, %c0_i32_0 : i32, i32
  }
  func.func @transform_1(%arg0: i32) -> (i32, i32) {
    %c0_i32 = arith.constant 0 : i32
    %c0_i32_0 = arith.constant 0 : i32
    %c0_i32_1 = arith.constant 0 : i32
    return %c0_i32, %c0_i32_0 : i32, i32
  }
  func.func @transform_2(%arg0: i32) -> (i32, i32) {
    %c0_i32 = arith.constant 0 : i32
    %c0_i32_0 = arith.constant 0 : i32
    %c0_i32_1 = arith.constant 0 : i32
    return %c0_i32, %c0_i32_0 : i32, i32
  }
  func.func @transform_3(%arg0: i32) -> (i32, i32) {
    %c0_i32 = arith.constant 0 : i32
    %c0_i32_0 = arith.constant 0 : i32
    %c0_i32_1 = arith.constant 0 : i32
    return %c0_i32, %c0_i32_0 : i32, i32
  }
  func.func @transform_4(%arg0: i32) -> (i32, i32) {
    %c0_i32 = arith.constant 0 : i32
    %c0_i32_0 = arith.constant 0 : i32
    %c0_i32_1 = arith.constant 0 : i32
    return %c0_i32, %c0_i32_0 : i32, i32
  }
  func.func @transform_5(%arg0: i32) -> (i32, i32) {
    %c0_i32 = arith.constant 0 : i32
    %c0_i32_0 = arith.constant 0 : i32
    return %arg0, %c0_i32 : i32, i32
  }
  func.func @transform_6(%arg0: i32) -> (i32, i32) {
    %c0_i32 = arith.constant 0 : i32
    %c0_i32_0 = arith.constant 0 : i32
    return %arg0, %c0_i32 : i32, i32
  }
  func.func @transform_7(%arg0: i32) -> (i32, i32) {
    %c0_i32 = arith.constant 0 : i32
    %c0_i32_0 = arith.constant 0 : i32
    return %c0_i32, %arg0 : i32, i32
  }
  func.func @transform_8(%arg0: i32) -> (i32, i32) {
    %c0_i32 = arith.constant 0 : i32
    %c0_i32_0 = arith.constant 0 : i32
    return %c0_i32, %arg0 : i32, i32
  }
  func.func @transform_9(%arg0: i32) -> (i32, i32) {
    %c0_i32 = arith.constant 0 : i32
    %c0_i32_0 = arith.constant 0 : i32
    %c0_i32_1 = arith.constant 0 : i32
    return %c0_i32, %c0_i32_0 : i32, i32
  }
}

</mosaic_0001>

<llo_original>
// kernel: tpu_custom_call.1
$region0: #{tpu_custom_call.1}
  #allocation0 [shape = 'u32[]', space=smem, size = 0x4, offset = 0x4, fixed_abs, tag = 'smem constant byte address 0x4 - core index']
  #allocation1 [shape = 'u32[144,128]{1,0:T(1,128)}', space=vmem, size = 0x12000, scoped, tag = 'internal scratch']
  #allocation2 [shape = 'f32[16,128]{1,0:T(8,128)}', space=vmem, size = 0x2000, scoped, tag = 'scratch operand']
  #allocation3 [shape = 'f32[16,128]{1,0:T(8,128)}', space=vmem, size = 0x2000, scoped, tag = 'scratch operand']
  %s0 = inlined_call_operand.vmem [shape: f32[16,128], index: 0, kind: input, shape index: {}]
  %s1 = inlined_call_operand.vmem [shape: f32[16,128], index: 1, kind: input, shape index: {}]
  %s2 = inlined_call_operand.vmem [shape: f32[128,128], index: 2, kind: input, shape index: {}]
  %s3 = inlined_call_operand.vmem [shape: f32[128,128], index: 3, kind: input, shape index: {}]
  %s4 = inlined_call_operand.vmem [shape: f32[16,1], index: 4, kind: input, shape index: {}]
  %s5 = inlined_call_operand.vmem [shape: s32[384,1], index: 5, kind: input, shape index: {}]
  %s6 = inlined_call_operand.vmem [shape: s32[384,1], index: 6, kind: input, shape index: {}]
  %s7 = inlined_call_operand.vmem [shape: s32[1,384], index: 7, kind: input, shape index: {}]
  %s8 = inlined_call_operand.vmem [shape: s32[1,384], index: 8, kind: input, shape index: {}]
  %s9 = inlined_call_operand.hbm [shape: f32[16,128], index: 9, kind: output, shape index: {}]
  %s10 = sld [smem:[#allocation0]]
  $region77: #{tpu_custom_call.1} parent=0
    _
  %s12 = ssub.s32 1, %s10
  %s13 = scalar_select 0, %s12, %s10
  $region1: #{tpu_custom_call.1} parent=0
    #allocation4 [shape = 'u8[8192]{0}', space=vmem, size = 0x2000, scoped, tag = 'output window, operand 0, single buffered']
    #allocation5 [shape = 's32[2]{0}', space=sflag, size = 0x8, scoped, tag = 'scoped memory for tpu_custom_call.1']
    %14 = vsyncpa [#allocation5], 0
    loop: start=0, step=1, limit=5
    $region2: #{tpu_custom_call.1} parent=1 // loop_pre_header
      _
    $region3: #{tpu_custom_call.1} parent=1 // loop_header
      %s16 = sphi 0, %s20
      %p17 = scmp.ge.s32.totalorder %s16, 5
      %s24 = sphi 0, %s24
      %s26 = sphi 0, %s24
      %s27 = sphi 0, %s26
      %s41 = sphi 0, %s27
      %s45 = sphi 0, %s45
      %s47 = sphi 0, %s45
      %s48 = sphi 0, %s47
      %s62 = sphi 0, %s48
      %s66 = sphi 0, %s66
      %s68 = sphi 0, %s66
      %s69 = sphi 0, %s68
      %s83 = sphi 0, %s69
      %s87 = sphi 0, %s87
      %s89 = sphi 0, %s87
      %s90 = sphi 0, %s89
      %s104 = sphi 0, %s90
      %s108 = sphi 0, %s108
      %s110 = sphi 0, %s108
      %s111 = sphi 0, %s110
      %s125 = sphi 0, %s111
      %s131 = sphi 0, %s133
      %s134 = sphi 0, %s131
      %s135 = sphi 0, %s134
      %s151 = sphi 0, %s135
      %s157 = sphi 0, %s159
      %s160 = sphi 0, %s157
      %s161 = sphi 0, %s160
      %s177 = sphi 0, %s161
      %s183 = sphi 0, %s185
      %s186 = sphi 0, %s183
      %s187 = sphi 0, %s186
      %s203 = sphi 0, %s187
      %s209 = sphi 0, %s211
      %s212 = sphi 0, %s209
      %s213 = sphi 0, %s212
      %s229 = sphi 0, %s213
      %s233 = sphi 0, %s233
      %s235 = sphi 0, %s233
      %s236 = sphi 0, %s235
      %s250 = sphi 0, %s236
    $region4: #{tpu_custom_call.1} parent=1 // loop_header_branch
      %19 = sbr.rel (%p17) target = $region8
    $region5: #{tpu_custom_call.1} parent=1 // loop_body
      %s21 = ssub.s32 %s16, 1
      %s22 = ssub.s32 %s16, 2
      %s23 = sadd.s32 %s16, 1
      %s25 = sadd.s32 %s24, 1
      %p28 = scmp.eq.s32.totalorder %s16, 2
      %p29 = scmp.ne.s32.totalorder %s24, %s26
      %p30 = scmp.eq.s32.totalorder %s16, 0
      %p31 = por %p29, %p30
      %p32 = scmp.ne.s32.totalorder %s24, %s26
      %p33 = scmp.eq.s32.totalorder %s21, 2
      %p34 = por %p32, %p33
      %p35 = scmp.ne.s32.totalorder %s26, %s27
      %p36 = scmp.eq.s32.totalorder %s21, 0
      %p37 = por %p35, %p36
      %p38 = scmp.ne.s32.totalorder %s26, %s27
      %p39 = scmp.eq.s32.totalorder %s22, 2
      %p40 = por %p38, %p39
      %p42 = scmp.ne.s32.totalorder %s27, %s41
      %p43 = scmp.eq.s32.totalorder %s22, 0
      %p44 = por %p42, %p43
      %s46 = sadd.s32 %s45, 1
      %p49 = scmp.eq.s32.totalorder %s16, 2
      %p50 = scmp.ne.s32.totalorder %s45, %s47
      %p51 = scmp.eq.s32.totalorder %s16, 0
      %p52 = por %p50, %p51
      %p53 = scmp.ne.s32.totalorder %s45, %s47
      %p54 = scmp.eq.s32.totalorder %s21, 2
      %p55 = por %p53, %p54
      %p56 = scmp.ne.s32.totalorder %s47, %s48
      %p57 = scmp.eq.s32.totalorder %s21, 0
      %p58 = por %p56, %p57
      %p59 = scmp.ne.s32.totalorder %s47, %s48
      %p60 = scmp.eq.s32.totalorder %s22, 2
      %p61 = por %p59, %p60
      %p63 = scmp.ne.s32.totalorder %s48, %s62
      %p64 = scmp.eq.s32.totalorder %s22, 0
      %p65 = por %p63, %p64
      %s67 = sadd.s32 %s66, 1
      %p70 = scmp.eq.s32.totalorder %s16, 2
      %p71 = scmp.ne.s32.totalorder %s66, %s68
      %p72 = scmp.eq.s32.totalorder %s16, 0
      %p73 = por %p71, %p72
      %p74 = scmp.ne.s32.totalorder %s66, %s68
      %p75 = scmp.eq.s32.totalorder %s21, 2
      %p76 = por %p74, %p75
      %p77 = scmp.ne.s32.totalorder %s68, %s69
      %p78 = scmp.eq.s32.totalorder %s21, 0
      %p79 = por %p77, %p78
      %p80 = scmp.ne.s32.totalorder %s68, %s69
      %p81 = scmp.eq.s32.totalorder %s22, 2
      %p82 = por %p80, %p81
      %p84 = scmp.ne.s32.totalorder %s69, %s83
      %p85 = scmp.eq.s32.totalorder %s22, 0
      %p86 = por %p84, %p85
      %s88 = sadd.s32 %s87, 1
      %p91 = scmp.eq.s32.totalorder %s16, 2
      %p92 = scmp.ne.s32.totalorder %s87, %s89
      %p93 = scmp.eq.s32.totalorder %s16, 0
      %p94 = por %p92, %p93
      %p95 = scmp.ne.s32.totalorder %s87, %s89
      %p96 = scmp.eq.s32.totalorder %s21, 2
      %p97 = por %p95, %p96
      %p98 = scmp.ne.s32.totalorder %s89, %s90
      %p99 = scmp.eq.s32.totalorder %s21, 0
      %p100 = por %p98, %p99
      %p101 = scmp.ne.s32.totalorder %s89, %s90
      %p102 = scmp.eq.s32.totalorder %s22, 2
      %p103 = por %p101, %p102
      %p105 = scmp.ne.s32.totalorder %s90, %s104
      %p106 = scmp.eq.s32.totalorder %s22, 0
      %p107 = por %p105, %p106
      %s109 = sadd.s32 %s108, 1
      %p112 = scmp.eq.s32.totalorder %s16, 2
      %p113 = scmp.ne.s32.totalorder %s108, %s110
      %p114 = scmp.eq.s32.totalorder %s16, 0
      %p115 = por %p113, %p114
      %p116 = scmp.ne.s32.totalorder %s108, %s110
      %p117 = scmp.eq.s32.totalorder %s21, 2
      %p118 = por %p116, %p117
      %p119 = scmp.ne.s32.totalorder %s110, %s111
      %p120 = scmp.eq.s32.totalorder %s21, 0
      %p121 = por %p119, %p120
      %p122 = scmp.ne.s32.totalorder %s110, %s111
      %p123 = scmp.eq.s32.totalorder %s22, 2
      %p124 = por %p122, %p123
      %p126 = scmp.ne.s32.totalorder %s111, %s125
      %p127 = scmp.eq.s32.totalorder %s22, 0
      %p128 = por %p126, %p127
      %s129 = ssub.s32 %s16, %s23
      %p130 = scmp.eq.s32.totalorder %s129, 0
      %s132 = sadd.s32 %s131, 1
      %s133 = scalar_select %p130, %s131, %s132
      %p136 = pneg %p130
      %p137 = scmp.eq.s32.totalorder %s16, 2
      %p138 = por %p136, %p137
      %p139 = scmp.ne.s32.totalorder %s131, %s134
      %p140 = scmp.eq.s32.totalorder %s16, 0
      %p141 = por %p139, %p140
      %p142 = scmp.ne.s32.totalorder %s131, %s134
      %p143 = scmp.eq.s32.totalorder %s21, 2
      %p144 = por %p142, %p143
      %p145 = scmp.ne.s32.totalorder %s134, %s135
      %p146 = scmp.eq.s32.totalorder %s21, 0
      %p147 = por %p145, %p146
      %p148 = scmp.ne.s32.totalorder %s134, %s135
      %p149 = scmp.eq.s32.totalorder %s22, 2
      %p150 = por %p148, %p149
      %p152 = scmp.ne.s32.totalorder %s135, %s151
      %p153 = scmp.eq.s32.totalorder %s22, 0
      %p154 = por %p152, %p153
      %s155 = ssub.s32 %s16, %s23
      %p156 = scmp.eq.s32.totalorder %s155, 0
      %s158 = sadd.s32 %s157, 1
      %s159 = scalar_select %p156, %s157, %s158
      %p162 = pneg %p156
      %p163 = scmp.eq.s32.totalorder %s16, 2
      %p164 = por %p162, %p163
      %p165 = scmp.ne.s32.totalorder %s157, %s160
      %p166 = scmp.eq.s32.totalorder %s16, 0
      %p167 = por %p165, %p166
      %p168 = scmp.ne.s32.totalorder %s157, %s160
      %p169 = scmp.eq.s32.totalorder %s21, 2
      %p170 = por %p168, %p169
      %p171 = scmp.ne.s32.totalorder %s160, %s161
      %p172 = scmp.eq.s32.totalorder %s21, 0
      %p173 = por %p171, %p172
      %p174 = scmp.ne.s32.totalorder %s160, %s161
      %p175 = scmp.eq.s32.totalorder %s22, 2
      %p176 = por %p174, %p175
      %p178 = scmp.ne.s32.totalorder %s161, %s177
      %p179 = scmp.eq.s32.totalorder %s22, 0
      %p180 = por %p178, %p179
      %s181 = ssub.s32 %s16, %s23
      %p182 = scmp.eq.s32.totalorder %s181, 0
      %s184 = sadd.s32 %s183, 1
      %s185 = scalar_select %p182, %s183, %s184
      %p188 = pneg %p182
      %p189 = scmp.eq.s32.totalorder %s16, 2
      %p190 = por %p188, %p189
      %p191 = scmp.ne.s32.totalorder %s183, %s186
      %p192 = scmp.eq.s32.totalorder %s16, 0
      %p193 = por %p191, %p192
      %p194 = scmp.ne.s32.totalorder %s183, %s186
      %p195 = scmp.eq.s32.totalorder %s21, 2
      %p196 = por %p194, %p195
      %p197 = scmp.ne.s32.totalorder %s186, %s187
      %p198 = scmp.eq.s32.totalorder %s21, 0
      %p199 = por %p197, %p198
      %p200 = scmp.ne.s32.totalorder %s186, %s187
      %p201 = scmp.eq.s32.totalorder %s22, 2
      %p202 = por %p200, %p201
      %p204 = scmp.ne.s32.totalorder %s187, %s203
      %p205 = scmp.eq.s32.totalorder %s22, 0
      %p206 = por %p204, %p205
      %s207 = ssub.s32 %s16, %s23
      %p208 = scmp.eq.s32.totalorder %s207, 0
      %s210 = sadd.s32 %s209, 1
      %s211 = scalar_select %p208, %s209, %s210
      %p214 = pneg %p208
      %p215 = scmp.eq.s32.totalorder %s16, 2
      %p216 = por %p214, %p215
      %p217 = scmp.ne.s32.totalorder %s209, %s212
      %p218 = scmp.eq.s32.totalorder %s16, 0
      %p219 = por %p217, %p218
      %p220 = scmp.ne.s32.totalorder %s209, %s212
      %p221 = scmp.eq.s32.totalorder %s21, 2
      %p222 = por %p220, %p221
      %p223 = scmp.ne.s32.totalorder %s212, %s213
      %p224 = scmp.eq.s32.totalorder %s21, 0
      %p225 = por %p223, %p224
      %p226 = scmp.ne.s32.totalorder %s212, %s213
      %p227 = scmp.eq.s32.totalorder %s22, 2
      %p228 = por %p226, %p227
      %p230 = scmp.ne.s32.totalorder %s213, %s229
      %p231 = scmp.eq.s32.totalorder %s22, 0
      %p232 = por %p230, %p231
      %s234 = sadd.s32 %s233, 1
      %p237 = scmp.eq.s32.totalorder %s16, 2
      %p238 = scmp.ne.s32.totalorder %s233, %s235
      %p239 = scmp.eq.s32.totalorder %s16, 0
      %p240 = por %p238, %p239
      %p241 = scmp.ne.s32.totalorder %s233, %s235
      %p242 = scmp.eq.s32.totalorder %s21, 2
      %p243 = por %p241, %p242
      %p244 = scmp.ne.s32.totalorder %s235, %s236
      %p245 = scmp.eq.s32.totalorder %s21, 0
      %p246 = por %p244, %p245
      %p247 = scmp.ne.s32.totalorder %s235, %s236
      %p248 = scmp.eq.s32.totalorder %s22, 2
      %p249 = por %p247, %p248
      %p251 = scmp.ne.s32.totalorder %s236, %s250
      %p252 = scmp.eq.s32.totalorder %s22, 0
      %p253 = por %p251, %p252
      %p254 = scmp.le.s32.totalorder 1, %s16
      %p255 = scmp.lt.s32.totalorder %s16, 4
      %p256 = pnand %p254, %p255
      %p257 = pneg %p256
      // Predicated region
      $region9: #{tpu_custom_call.1} parent=5 // pred_check
        _
      $region10: #{tpu_custom_call.1} parent=5 // pred_check_branch
        %259 = sbr.rel (%p256) target = $region12
      $region11: #{tpu_custom_call.1} parent=5 // pred_region
        %s260 = ssub.s32 %s16, 1
        // Predicated region
        $region13: #{tpu_custom_call.1} parent=11 // pred_check
          %p261 = pneg %p37
        $region14: #{tpu_custom_call.1} parent=11 // pred_check_branch
          %263 = sbr.rel (%p261) target = $region16
        $region15: #{tpu_custom_call.1} parent=11 // pred_region
          _
        $region16: #{tpu_custom_call.1} parent=11 // pred_fallthru
          _
        // Predicated region
        $region17: #{tpu_custom_call.1} parent=11 // pred_check
          %p264 = pneg %p58
        $region18: #{tpu_custom_call.1} parent=11 // pred_check_branch
          %266 = sbr.rel (%p264) target = $region20
        $region19: #{tpu_custom_call.1} parent=11 // pred_region
          _
        $region20: #{tpu_custom_call.1} parent=11 // pred_fallthru
          _
        // Predicated region
        $region21: #{tpu_custom_call.1} parent=11 // pred_check
          %p267 = pneg %p79
        $region22: #{tpu_custom_call.1} parent=11 // pred_check_branch
          %269 = sbr.rel (%p267) target = $region24
        $region23: #{tpu_custom_call.1} parent=11 // pred_region
          _
        $region24: #{tpu_custom_call.1} parent=11 // pred_fallthru
          _
        // Predicated region
        $region25: #{tpu_custom_call.1} parent=11 // pred_check
          %p270 = pneg %p100
        $region26: #{tpu_custom_call.1} parent=11 // pred_check_branch
          %272 = sbr.rel (%p270) target = $region28
        $region27: #{tpu_custom_call.1} parent=11 // pred_region
          _
        $region28: #{tpu_custom_call.1} parent=11 // pred_fallthru
          _
        // Predicated region
        $region29: #{tpu_custom_call.1} parent=11 // pred_check
          %p273 = pneg %p121
        $region30: #{tpu_custom_call.1} parent=11 // pred_check_branch
          %275 = sbr.rel (%p273) target = $region32
        $region31: #{tpu_custom_call.1} parent=11 // pred_region
          _
        $region32: #{tpu_custom_call.1} parent=11 // pred_fallthru
          _
      $region12: #{tpu_custom_call.1} parent=5 // pred_fallthru
        _
      %p276 = scmp.lt.s32.totalorder %s16, 3
      // Predicated region
      $region33: #{tpu_custom_call.1} parent=5 // pred_check
        %p277 = pneg %p276
      $region34: #{tpu_custom_call.1} parent=5 // pred_check_branch
        %279 = sbr.rel (%p277) target = $region36
      $region35: #{tpu_custom_call.1} parent=5 // pred_region
        // Predicated region
        $region37: #{tpu_custom_call.1} parent=35 // pred_check
          %p280 = pneg %p141
        $region38: #{tpu_custom_call.1} parent=35 // pred_check_branch
          %282 = sbr.rel (%p280) target = $region40
        $region39: #{tpu_custom_call.1} parent=35 // pred_region
          %s283 = smul.u32 16, %s16
          %p284 = scmp.lt.s32.totalorder %s283, 47
          %s285 = scalar_select %p284, %s283, 47
          %s286 = smul.addr %s285, 8
          %s287 = scalar_lea.vmem %s5, %s286
          %s288 = smul.u32 16, %s16
        $region40: #{tpu_custom_call.1} parent=35 // pred_fallthru
          _
        // Predicated region
        $region41: #{tpu_custom_call.1} parent=35 // pred_check
          %p289 = pneg %p167
        $region42: #{tpu_custom_call.1} parent=35 // pred_check_branch
          %291 = sbr.rel (%p289) target = $region44
        $region43: #{tpu_custom_call.1} parent=35 // pred_region
          %s292 = smul.u32 16, %s16
          %p293 = scmp.lt.s32.totalorder %s292, 47
          %s294 = scalar_select %p293, %s292, 47
          %s295 = smul.addr %s294, 8
          %s296 = scalar_lea.vmem %s6, %s295
          %s297 = smul.u32 16, %s16
        $region44: #{tpu_custom_call.1} parent=35 // pred_fallthru
          _
        // Predicated region
        $region45: #{tpu_custom_call.1} parent=35 // pred_check
          %p298 = pneg %p193
        $region46: #{tpu_custom_call.1} parent=35 // pred_check_branch
          %300 = sbr.rel (%p298) target = $region48
        $region47: #{tpu_custom_call.1} parent=35 // pred_region
          %p301 = scmp.lt.s32.totalorder %s16, 2
          %s302 = scalar_select %p301, %s16, 2
          %s303 = scalar_lea.vmem %s7, %s302
        $region48: #{tpu_custom_call.1} parent=35 // pred_fallthru
          _
        // Predicated region
        $region49: #{tpu_custom_call.1} parent=35 // pred_check
          %p304 = pneg %p219
        $region50: #{tpu_custom_call.1} parent=35 // pred_check_branch
          %306 = sbr.rel (%p304) target = $region52
        $region51: #{tpu_custom_call.1} parent=35 // pred_region
          %p307 = scmp.lt.s32.totalorder %s16, 2
          %s308 = scalar_select %p307, %s16, 2
          %s309 = scalar_lea.vmem %s8, %s308
        $region52: #{tpu_custom_call.1} parent=35 // pred_fallthru
          _
      $region36: #{tpu_custom_call.1} parent=5 // pred_fallthru
        _
      %p310 = scmp.le.s32.totalorder 1, %s16
      %p311 = scmp.lt.s32.totalorder %s16, 4
      %p312 = pnand %p310, %p311
      %p313 = pneg %p312
      // Predicated region
      $region53: #{tpu_custom_call.1} parent=5 // pred_check
        _
      $region54: #{tpu_custom_call.1} parent=5 // pred_check_branch
        %315 = sbr.rel (%p312) target = $region56
      $region55: #{tpu_custom_call.1} parent=5 // pred_region
        %s316 = ssub.s32 %s16, 1
        %p317 = pneg %p37
        %p318 = pneg %p34
        %p319 = pneg %p58
        %p320 = pneg %p55
        %p321 = pneg %p79
        %p322 = pneg %p76
        %p323 = pneg %p100
        %p324 = pneg %p97
        %p325 = pneg %p121
        %p326 = pneg %p118
        %s327 = smul.u32 16, %s21
        %p328 = scmp.lt.s32.totalorder %s327, 47
        %s329 = scalar_select %p328, %s327, 47
        %s330 = smul.addr %s329, 8
        %s331 = scalar_lea.vmem %s5, %s330
        %p332 = pneg %p147
        %p333 = pneg %p144
        %s334 = smul.u32 16, %s21
        %p335 = scmp.lt.s32.totalorder %s334, 47
        %s336 = scalar_select %p335, %s334, 47
        %s337 = smul.addr %s336, 8
        %s338 = scalar_lea.vmem %s6, %s337
        %p339 = pneg %p173
        %p340 = pneg %p170
        %p341 = scmp.lt.s32.totalorder %s21, 2
        %s342 = scalar_select %p341, %s21, 2
        %s343 = scalar_lea.vmem %s7, %s342
        %p344 = pneg %p199
        %p345 = pneg %p196
        %p346 = scmp.lt.s32.totalorder %s21, 2
        %s347 = scalar_select %p346, %s21, 2
        %s348 = scalar_lea.vmem %s8, %s347
        %p349 = pneg %p225
        %p350 = pneg %p222
        %p351 = pneg %p246
        %p352 = pneg %p243
        %s353 = smul.u32 16, %s21
        %p354 = scmp.lt.s32.totalorder %s353, 47
        %s355 = scalar_select %p354, %s353, 47
        %s356 = smul.addr %s355, 8
        %s357 = scalar_lea.vmem %s5, %s356
        %s358 = smul.u32 16, %s21
        %s359 = smul.u32 16, %s21
        %p360 = scmp.lt.s32.totalorder %s359, 47
        %s361 = scalar_select %p360, %s359, 47
        %s362 = smul.addr %s361, 8
        %s363 = scalar_lea.vmem %s6, %s362
        %s364 = smul.u32 16, %s21
        %p365 = scmp.lt.s32.totalorder %s21, 2
        %s366 = scalar_select %p365, %s21, 2
        %s367 = scalar_lea.vmem %s7, %s366
        %p368 = scmp.lt.s32.totalorder %s21, 2
        %s369 = scalar_select %p368, %s21, 2
        %s370 = scalar_lea.vmem %s8, %s369
        %p371 = scmp.eq.s32.totalorder %s21, 0
        // Predicated region
        $region57: #{tpu_custom_call.1} parent=55 // pred_check
          %p372 = pneg %p371
        $region58: #{tpu_custom_call.1} parent=55 // pred_check_branch
          %374 = sbr.rel (%p372) target = $region60
        $region59: #{tpu_custom_call.1} parent=55 // pred_region
          %v375 = vld [vmem:[%s0] sm:$0xff]
          %v376 = vld [vmem:[%s0 + $0x8] sm:$0xff]
          %v377 = vld [vmem:[%s1] sm:$0xff]
          %v378 = vld [vmem:[%s1 + $0x8] sm:$0xff]
          %v379 = vadd.f32 %v375, %v377
          %v380 = vadd.f32 %v376, %v378
          %v381 = vld [vmem:[%s2] sm:$0xff]
          %v382 = vld [vmem:[%s2 + $0x8] sm:$0xff]
          %v383 = vld [vmem:[%s2 + $0x10] sm:$0xff]
          %v384 = vld [vmem:[%s2 + $0x18] sm:$0xff]
          %v385 = vld [vmem:[%s2 + $0x20] sm:$0xff]
          %v386 = vld [vmem:[%s2 + $0x28] sm:$0xff]
          %v387 = vld [vmem:[%s2 + $0x30] sm:$0xff]
          %v388 = vld [vmem:[%s2 + $0x38] sm:$0xff]
          %v389 = vld [vmem:[%s2 + $0x40] sm:$0xff]
          %v390 = vld [vmem:[%s2 + $0x48] sm:$0xff]
          %v391 = vld [vmem:[%s2 + $0x50] sm:$0xff]
          %v392 = vld [vmem:[%s2 + $0x58] sm:$0xff]
          %v393 = vld [vmem:[%s2 + $0x60] sm:$0xff]
          %v394 = vld [vmem:[%s2 + $0x68] sm:$0xff]
          %v395 = vld [vmem:[%s2 + $0x70] sm:$0xff]
          %v396 = vld [vmem:[%s2 + $0x78] sm:$0xff]
          %397 = vmatprep.subr.mxu0 0.0
          %398 = vmatpush1.msra.mxu0 %v381
          %399 = vmatprep.subr.mxu0 0.0
          %400 = vmatpush1.msra.mxu0 %v382
          %401 = vmatprep.subr.mxu0 0.0
          %402 = vmatpush1.msra.mxu0 %v383
          %403 = vmatprep.subr.mxu0 0.0
          %404 = vmatpush1.msra.mxu0 %v384
          %405 = vmatprep.subr.mxu0 0.0
          %406 = vmatpush1.msra.mxu0 %v385
          %407 = vmatprep.subr.mxu0 0.0
          %408 = vmatpush1.msra.mxu0 %v386
          %409 = vmatprep.subr.mxu0 0.0
          %410 = vmatpush1.msra.mxu0 %v387
          %411 = vmatprep.subr.mxu0 0.0
          %412 = vmatpush1.msra.mxu0 %v388
          %413 = vmatprep.subr.mxu0 0.0
          %414 = vmatpush1.msra.mxu0 %v389
          %415 = vmatprep.subr.mxu0 0.0
          %416 = vmatpush1.msra.mxu0 %v390
          %417 = vmatprep.subr.mxu0 0.0
          %418 = vmatpush1.msra.mxu0 %v391
          %419 = vmatprep.subr.mxu0 0.0
          %420 = vmatpush1.msra.mxu0 %v392
          %421 = vmatprep.subr.mxu0 0.0
          %422 = vmatpush1.msra.mxu0 %v393
          %423 = vmatprep.subr.mxu0 0.0
          %424 = vmatpush1.msra.mxu0 %v394
          %425 = vmatprep.subr.mxu0 0.0
          %426 = vmatpush1.msra.mxu0 %v395
          %427 = vmatprep.subr.mxu0 0.0
          %428 = vmatpush1.msra.mxu0 %v396
          %429 = vmatprep.subr.mxu0 0.0
          %430 = vmatpush1.msra.mxu0 0.0
          %431 = vmatprep.subr.mxu0 0.0
          %432 = vmatpush1.msra.mxu0 0.0
          %433 = vmatprep.subr.mxu0 0.0
          %434 = vmatpush1.msra.mxu0 0.0
          %435 = vmatprep.subr.mxu0 0.0
          %436 = vmatpush1.msra.mxu0 0.0
          %437 = vmatprep.subr.mxu0 0.0
          %438 = vmatpush1.msra.mxu0 0.0
          %439 = vmatprep.subr.mxu0 0.0
          %440 = vmatpush1.msra.mxu0 0.0
          %441 = vmatprep.subr.mxu0 0.0
          %442 = vmatpush1.msra.mxu0 0.0
          %443 = vmatprep.subr.mxu0 0.0
          %444 = vmatpush1.msra.mxu0 0.0
          %445 = vmatprep.subr.mxu0 0.0
          %446 = vmatpush1.msra.mxu0 0.0
          %447 = vmatprep.subr.mxu0 0.0
          %448 = vmatpush1.msra.mxu0 0.0
          %449 = vmatprep.subr.mxu0 0.0
          %450 = vmatpush1.msra.mxu0 0.0
          %451 = vmatprep.subr.mxu0 0.0
          %452 = vmatpush1.msra.mxu0 0.0
          %453 = vmatprep.subr.mxu0 0.0
          %454 = vmatpush1.msra.mxu0 0.0
          %455 = vmatprep.subr.mxu0 0.0
          %456 = vmatpush1.msra.mxu0 0.0
          %457 = vmatprep.subr.mxu0 0.0
          %458 = vmatpush1.msra.mxu0 0.0
          %459 = vmatprep.subr.mxu0 0.0
          %460 = vmatpush1.msra.mxu0 0.0
          %461 = vmatprep.mubr.f32.mxu0 0.0
          %462 = vmatmul.mubr.f32.gmra.mrb[0].mxu0 %v379
          %v463 = vpop.f32.mrb[0].mxu0
          %v464 = vadd.f32 0.0, %v463
          %v465 = vpop.f32.mrb[0].mxu0
          %466 = vmatprep.mubr.f32.mxu0 0.0
          %467 = vmatmul.mubr.f32.gmra.mrb[0].mxu0 %v380
          %v468 = vpop.f32.mrb[0].mxu0
          %v469 = vadd.f32 0.0, %v468
          %v470 = vpop.f32.mrb[0].mxu0
          %471 = vdwg.mxu0
          %v472 = vld [vmem:[%s4] sm:$0xff]
          %v473 = vld [vmem:[%s4 + $0x8] sm:$0xff]
          %475 = vset.pattern.permute.xlu0 0
          %476 = vperm.xlu0 %475, %v472
          %v477 = vpop.permute.xlu0 %476
          %480 = vset.pattern.permute.xlu0 0
          %481 = vperm.xlu0 %480, %v473
          %v482 = vpop.permute.xlu0 %481
          %v484 = vmul.f32 %v477, %v464
          %v485 = vmul.f32 %v482, %v469
          %486 = vst [vmem:[#allocation2] sm:$0xff] %v484
          %487 = vst [vmem:[#allocation2 + $0x8] sm:$0xff] %v485
          %488 = vst [vmem:[#allocation3] sm:$0xff] 0.0
          %489 = vst [vmem:[#allocation3 + $0x8] sm:$0xff] 0.0
        $region60: #{tpu_custom_call.1} parent=55 // pred_fallthru
          _
        %v490 = vlaneseq
        %v491 = vand.u32 %v490, 127
        %v492 = vld [vmem:[%s357] sm:$0xff]
        %v493 = vld [vmem:[%s357 + $0x8] sm:$0xff]
        %v494 = vld [vmem:[%s357 + $0x10] sm:$0xff]
        %v495 = vld [vmem:[%s357 + $0x18] sm:$0xff]
        %v496 = vld [vmem:[%s357 + $0x20] sm:$0xff]
        %v497 = vld [vmem:[%s357 + $0x28] sm:$0xff]
        %v498 = vld [vmem:[%s357 + $0x30] sm:$0xff]
        %v499 = vld [vmem:[%s357 + $0x38] sm:$0xff]
        %v500 = vld [vmem:[%s357 + $0x40] sm:$0xff]
        %v501 = vld [vmem:[%s357 + $0x48] sm:$0xff]
        %v502 = vld [vmem:[%s357 + $0x50] sm:$0xff]
        %v503 = vld [vmem:[%s357 + $0x58] sm:$0xff]
        %v504 = vld [vmem:[%s357 + $0x60] sm:$0xff]
        %v505 = vld [vmem:[%s357 + $0x68] sm:$0xff]
        %v506 = vld [vmem:[%s357 + $0x70] sm:$0xff]
        %v507 = vld [vmem:[%s357 + $0x78] sm:$0xff]
        %508 = vset.pattern.permute.xlu0 0
        %509 = vperm.xlu0 %508, %v492
        %v510 = vpop.permute.xlu0 %509
        %511 = vset.pattern.permute.xlu0 0
        %512 = vperm.xlu0 %511, %v493
        %v513 = vpop.permute.xlu0 %512
        %514 = vset.pattern.permute.xlu0 0
        %515 = vperm.xlu0 %514, %v494
        %v516 = vpop.permute.xlu0 %515
        %517 = vset.pattern.permute.xlu0 0
        %518 = vperm.xlu0 %517, %v495
        %v519 = vpop.permute.xlu0 %518
        %520 = vset.pattern.permute.xlu0 0
        %521 = vperm.xlu0 %520, %v496
        %v522 = vpop.permute.xlu0 %521
        %523 = vset.pattern.permute.xlu0 0
        %524 = vperm.xlu0 %523, %v497
        %v525 = vpop.permute.xlu0 %524
        %526 = vset.pattern.permute.xlu0 0
        %527 = vperm.xlu0 %526, %v498
        %v528 = vpop.permute.xlu0 %527
        %529 = vset.pattern.permute.xlu0 0
        %530 = vperm.xlu0 %529, %v499
        %v531 = vpop.permute.xlu0 %530
        %532 = vset.pattern.permute.xlu0 0
        %533 = vperm.xlu0 %532, %v500
        %v534 = vpop.permute.xlu0 %533
        %535 = vset.pattern.permute.xlu0 0
        %536 = vperm.xlu0 %535, %v501
        %v537 = vpop.permute.xlu0 %536
        %538 = vset.pattern.permute.xlu0 0
        %539 = vperm.xlu0 %538, %v502
        %v540 = vpop.permute.xlu0 %539
        %541 = vset.pattern.permute.xlu0 0
        %542 = vperm.xlu0 %541, %v503
        %v543 = vpop.permute.xlu0 %542
        %544 = vset.pattern.permute.xlu0 0
        %545 = vperm.xlu0 %544, %v504
        %v546 = vpop.permute.xlu0 %545
        %547 = vset.pattern.permute.xlu0 0
        %548 = vperm.xlu0 %547, %v505
        %v549 = vpop.permute.xlu0 %548
        %550 = vset.pattern.permute.xlu0 0
        %551 = vperm.xlu0 %550, %v506
        %v552 = vpop.permute.xlu0 %551
        %553 = vset.pattern.permute.xlu0 0
        %554 = vperm.xlu0 %553, %v507
        %v555 = vpop.permute.xlu0 %554
        %vm556 = vcmp.eq.s32.totalorder %v510, %v491
        %vm557 = vcmp.eq.s32.totalorder %v513, %v491
        %vm558 = vcmp.eq.s32.totalorder %v516, %v491
        %vm559 = vcmp.eq.s32.totalorder %v519, %v491
        %vm560 = vcmp.eq.s32.totalorder %v522, %v491
        %vm561 = vcmp.eq.s32.totalorder %v525, %v491
        %vm562 = vcmp.eq.s32.totalorder %v528, %v491
        %vm563 = vcmp.eq.s32.totalorder %v531, %v491
        %vm564 = vcmp.eq.s32.totalorder %v534, %v491
        %vm565 = vcmp.eq.s32.totalorder %v537, %v491
        %vm566 = vcmp.eq.s32.totalorder %v540, %v491
        %vm567 = vcmp.eq.s32.totalorder %v543, %v491
        %vm568 = vcmp.eq.s32.totalorder %v546, %v491
        %vm569 = vcmp.eq.s32.totalorder %v549, %v491
        %vm570 = vcmp.eq.s32.totalorder %v552, %v491
        %vm571 = vcmp.eq.s32.totalorder %v555, %v491
        %v572 = vsel %vm556, 1, 0
        %v573 = vsel %vm557, 1, 0
        %v574 = vsel %vm558, 1, 0
        %v575 = vsel %vm559, 1, 0
        %v576 = vsel %vm560, 1, 0
        %v577 = vsel %vm561, 1, 0
        %v578 = vsel %vm562, 1, 0
        %v579 = vsel %vm563, 1, 0
        %v580 = vsel %vm564, 1, 0
        %v581 = vsel %vm565, 1, 0
        %v582 = vsel %vm566, 1, 0
        %v583 = vsel %vm567, 1, 0
        %v584 = vsel %vm568, 1, 0
        %v585 = vsel %vm569, 1, 0
        %v586 = vsel %vm570, 1, 0
        %v587 = vsel %vm571, 1, 0
        %v588 = vcvt.s32.f32 %v572
        %v589 = vcvt.s32.f32 %v573
        %v590 = vcvt.s32.f32 %v574
        %v591 = vcvt.s32.f32 %v575
        %v592 = vcvt.s32.f32 %v576
        %v593 = vcvt.s32.f32 %v577
        %v594 = vcvt.s32.f32 %v578
        %v595 = vcvt.s32.f32 %v579
        %v596 = vcvt.s32.f32 %v580
        %v597 = vcvt.s32.f32 %v581
        %v598 = vcvt.s32.f32 %v582
        %v599 = vcvt.s32.f32 %v583
        %v600 = vcvt.s32.f32 %v584
        %v601 = vcvt.s32.f32 %v585
        %v602 = vcvt.s32.f32 %v586
        %v603 = vcvt.s32.f32 %v587
        %v604 = vld [vmem:[%s363] sm:$0xff]
        %v605 = vld [vmem:[%s363 + $0x8] sm:$0xff]
        %v606 = vld [vmem:[%s363 + $0x10] sm:$0xff]
        %v607 = vld [vmem:[%s363 + $0x18] sm:$0xff]
        %v608 = vld [vmem:[%s363 + $0x20] sm:$0xff]
        %v609 = vld [vmem:[%s363 + $0x28] sm:$0xff]
        %v610 = vld [vmem:[%s363 + $0x30] sm:$0xff]
        %v611 = vld [vmem:[%s363 + $0x38] sm:$0xff]
        %v612 = vld [vmem:[%s363 + $0x40] sm:$0xff]
        %v613 = vld [vmem:[%s363 + $0x48] sm:$0xff]
        %v614 = vld [vmem:[%s363 + $0x50] sm:$0xff]
        %v615 = vld [vmem:[%s363 + $0x58] sm:$0xff]
        %v616 = vld [vmem:[%s363 + $0x60] sm:$0xff]
        %v617 = vld [vmem:[%s363 + $0x68] sm:$0xff]
        %v618 = vld [vmem:[%s363 + $0x70] sm:$0xff]
        %v619 = vld [vmem:[%s363 + $0x78] sm:$0xff]
        %620 = vset.pattern.permute.xlu0 0
        %621 = vperm.xlu0 %620, %v604
        %v622 = vpop.permute.xlu0 %621
        %623 = vset.pattern.permute.xlu0 0
        %624 = vperm.xlu0 %623, %v605
        %v625 = vpop.permute.xlu0 %624
        %626 = vset.pattern.permute.xlu0 0
        %627 = vperm.xlu0 %626, %v606
        %v628 = vpop.permute.xlu0 %627
        %629 = vset.pattern.permute.xlu0 0
        %630 = vperm.xlu0 %629, %v607
        %v631 = vpop.permute.xlu0 %630
        %632 = vset.pattern.permute.xlu0 0
        %633 = vperm.xlu0 %632, %v608
        %v634 = vpop.permute.xlu0 %633
        %635 = vset.pattern.permute.xlu0 0
        %636 = vperm.xlu0 %635, %v609
        %v637 = vpop.permute.xlu0 %636
        %638 = vset.pattern.permute.xlu0 0
        %639 = vperm.xlu0 %638, %v610
        %v640 = vpop.permute.xlu0 %639
        %641 = vset.pattern.permute.xlu0 0
        %642 = vperm.xlu0 %641, %v611
        %v643 = vpop.permute.xlu0 %642
        %644 = vset.pattern.permute.xlu0 0
        %645 = vperm.xlu0 %644, %v612
        %v646 = vpop.permute.xlu0 %645
        %647 = vset.pattern.permute.xlu0 0
        %648 = vperm.xlu0 %647, %v613
        %v649 = vpop.permute.xlu0 %648
        %650 = vset.pattern.permute.xlu0 0
        %651 = vperm.xlu0 %650, %v614
        %v652 = vpop.permute.xlu0 %651
        %653 = vset.pattern.permute.xlu0 0
        %654 = vperm.xlu0 %653, %v615
        %v655 = vpop.permute.xlu0 %654
        %656 = vset.pattern.permute.xlu0 0
        %657 = vperm.xlu0 %656, %v616
        %v658 = vpop.permute.xlu0 %657
        %659 = vset.pattern.permute.xlu0 0
        %660 = vperm.xlu0 %659, %v617
        %v661 = vpop.permute.xlu0 %660
        %662 = vset.pattern.permute.xlu0 0
        %663 = vperm.xlu0 %662, %v618
        %v664 = vpop.permute.xlu0 %663
        %665 = vset.pattern.permute.xlu0 0
        %666 = vperm.xlu0 %665, %v619
        %v667 = vpop.permute.xlu0 %666
        %vm668 = vcmp.eq.s32.totalorder %v622, %v491
        %vm669 = vcmp.eq.s32.totalorder %v625, %v491
        %vm670 = vcmp.eq.s32.totalorder %v628, %v491
        %vm671 = vcmp.eq.s32.totalorder %v631, %v491
        %vm672 = vcmp.eq.s32.totalorder %v634, %v491
        %vm673 = vcmp.eq.s32.totalorder %v637, %v491
        %vm674 = vcmp.eq.s32.totalorder %v640, %v491
        %vm675 = vcmp.eq.s32.totalorder %v643, %v491
        %vm676 = vcmp.eq.s32.totalorder %v646, %v491
        %vm677 = vcmp.eq.s32.totalorder %v649, %v491
        %vm678 = vcmp.eq.s32.totalorder %v652, %v491
        %vm679 = vcmp.eq.s32.totalorder %v655, %v491
        %vm680 = vcmp.eq.s32.totalorder %v658, %v491
        %vm681 = vcmp.eq.s32.totalorder %v661, %v491
        %vm682 = vcmp.eq.s32.totalorder %v664, %v491
        %vm683 = vcmp.eq.s32.totalorder %v667, %v491
        %v684 = vsel %vm668, 1, 0
        %v685 = vsel %vm669, 1, 0
        %v686 = vsel %vm670, 1, 0
        %v687 = vsel %vm671, 1, 0
        %v688 = vsel %vm672, 1, 0
        %v689 = vsel %vm673, 1, 0
        %v690 = vsel %vm674, 1, 0
        %v691 = vsel %vm675, 1, 0
        %v692 = vsel %vm676, 1, 0
        %v693 = vsel %vm677, 1, 0
        %v694 = vsel %vm678, 1, 0
        %v695 = vsel %vm679, 1, 0
        %v696 = vsel %vm680, 1, 0
        %v697 = vsel %vm681, 1, 0
        %v698 = vsel %vm682, 1, 0
        %v699 = vsel %vm683, 1, 0
        %v700 = vcvt.s32.f32 %v684
        %v701 = vcvt.s32.f32 %v685
        %v702 = vcvt.s32.f32 %v686
        %v703 = vcvt.s32.f32 %v687
        %v704 = vcvt.s32.f32 %v688
        %v705 = vcvt.s32.f32 %v689
        %v706 = vcvt.s32.f32 %v690
        %v707 = vcvt.s32.f32 %v691
        %v708 = vcvt.s32.f32 %v692
        %v709 = vcvt.s32.f32 %v693
        %v710 = vcvt.s32.f32 %v694
        %v711 = vcvt.s32.f32 %v695
        %v712 = vcvt.s32.f32 %v696
        %v713 = vcvt.s32.f32 %v697
        %v714 = vcvt.s32.f32 %v698
        %v715 = vcvt.s32.f32 %v699
        %v716 = vsub.f32 %v588, %v700
        %v717 = vsub.f32 %v589, %v701
        %v718 = vsub.f32 %v590, %v702
        %v719 = vsub.f32 %v591, %v703
        %v720 = vsub.f32 %v592, %v704
        %v721 = vsub.f32 %v593, %v705
        %v722 = vsub.f32 %v594, %v706
        %v723 = vsub.f32 %v595, %v707
        %v724 = vsub.f32 %v596, %v708
        %v725 = vsub.f32 %v597, %v709
        %v726 = vsub.f32 %v598, %v710
        %v727 = vsub.f32 %v599, %v711
        %v728 = vsub.f32 %v600, %v712
        %v729 = vsub.f32 %v601, %v713
        %v730 = vsub.f32 %v602, %v714
        %v731 = vsub.f32 %v603, %v715
        %v732 = vld [vmem:[#allocation2] sm:$0xff]
        %v733 = vld [vmem:[#allocation2 + $0x8] sm:$0xff]
        %vm734 = vcmask 130048
        %v736 = vsel %vm734, %v716, 0
        %v739 = vsel %vm734, %v717, 0
        %v742 = vsel %vm734, %v718, 0
        %v745 = vsel %vm734, %v719, 0
        %v748 = vsel %vm734, %v720, 0
        %v751 = vsel %vm734, %v721, 0
        %v754 = vsel %vm734, %v722, 0
        %v757 = vsel %vm734, %v723, 0
        %v760 = vsel %vm734, %v724, 0
        %v763 = vsel %vm734, %v725, 0
        %v766 = vsel %vm734, %v726, 0
        %v769 = vsel %vm734, %v727, 0
        %v772 = vsel %vm734, %v728, 0
        %v775 = vsel %vm734, %v729, 0
        %v778 = vsel %vm734, %v730, 0
        %v781 = vsel %vm734, %v731, 0
        %783 = vmatprep.subr.mxu0 0.0
        %784 = vmatpush1.msra.mxu0 %v732
        %785 = vmatprep.subr.mxu0 0.0
        %786 = vmatpush1.msra.mxu0 %v733
        %787 = vmatprep.subr.mxu0 0.0
        %788 = vmatpush1.msra.mxu0 0.0
        %789 = vmatprep.subr.mxu0 0.0
        %790 = vmatpush1.msra.mxu0 0.0
        %791 = vmatprep.subr.mxu0 0.0
        %792 = vmatpush1.msra.mxu0 0.0
        %793 = vmatprep.subr.mxu0 0.0
        %794 = vmatpush1.msra.mxu0 0.0
        %795 = vmatprep.subr.mxu0 0.0
        %796 = vmatpush1.msra.mxu0 0.0
        %797 = vmatprep.subr.mxu0 0.0
        %798 = vmatpush1.msra.mxu0 0.0
        %799 = vmatprep.subr.mxu0 0.0
        %800 = vmatpush1.msra.mxu0 0.0
        %801 = vmatprep.subr.mxu0 0.0
        %802 = vmatpush1.msra.mxu0 0.0
        %803 = vmatprep.subr.mxu0 0.0
        %804 = vmatpush1.msra.mxu0 0.0
        %805 = vmatprep.subr.mxu0 0.0
        %806 = vmatpush1.msra.mxu0 0.0
        %807 = vmatprep.subr.mxu0 0.0
        %808 = vmatpush1.msra.mxu0 0.0
        %809 = vmatprep.subr.mxu0 0.0
        %810 = vmatpush1.msra.mxu0 0.0
        %811 = vmatprep.subr.mxu0 0.0
        %812 = vmatpush1.msra.mxu0 0.0
        %813 = vmatprep.subr.mxu0 0.0
        %814 = vmatpush1.msra.mxu0 0.0
        %815 = vmatprep.subr.mxu0 0.0
        %816 = vmatpush1.msra.mxu0 0.0
        %817 = vmatprep.subr.mxu0 0.0
        %818 = vmatpush1.msra.mxu0 0.0
        %819 = vmatprep.subr.mxu0 0.0
        %820 = vmatpush1.msra.mxu0 0.0
        %821 = vmatprep.subr.mxu0 0.0
        %822 = vmatpush1.msra.mxu0 0.0
        %823 = vmatprep.subr.mxu0 0.0
        %824 = vmatpush1.msra.mxu0 0.0
        %825 = vmatprep.subr.mxu0 0.0
        %826 = vmatpush1.msra.mxu0 0.0
        %827 = vmatprep.subr.mxu0 0.0
        %828 = vmatpush1.msra.mxu0 0.0
        %829 = vmatprep.subr.mxu0 0.0
        %830 = vmatpush1.msra.mxu0 0.0
        %831 = vmatprep.subr.mxu0 0.0
        %832 = vmatpush1.msra.mxu0 0.0
        %833 = vmatprep.subr.mxu0 0.0
        %834 = vmatpush1.msra.mxu0 0.0
        %835 = vmatprep.subr.mxu0 0.0
        %836 = vmatpush1.msra.mxu0 0.0
        %837 = vmatprep.subr.mxu0 0.0
        %838 = vmatpush1.msra.mxu0 0.0
        %839 = vmatprep.subr.mxu0 0.0
        %840 = vmatpush1.msra.mxu0 0.0
        %841 = vmatprep.subr.mxu0 0.0
        %842 = vmatpush1.msra.mxu0 0.0
        %843 = vmatprep.subr.mxu0 0.0
        %844 = vmatpush1.msra.mxu0 0.0
        %845 = vmatprep.subr.mxu0 0.0
        %846 = vmatpush1.msra.mxu0 0.0
        %847 = vmatprep.mubr.f32.mxu0 0.0
        %848 = vmatmul.mubr.f32.gmra.mrb[0].mxu0 %v736
        %v849 = vpop.f32.mrb[0].mxu0
        %v850 = vadd.f32 0.0, %v849
        %v851 = vpop.f32.mrb[0].mxu0
        %852 = vmatprep.mubr.f32.mxu0 0.0
        %853 = vmatmul.mubr.f32.gmra.mrb[0].mxu0 %v739
        %v854 = vpop.f32.mrb[0].mxu0
        %v855 = vadd.f32 0.0, %v854
        %v856 = vpop.f32.mrb[0].mxu0
        %857 = vmatprep.mubr.f32.mxu0 0.0
        %858 = vmatmul.mubr.f32.gmra.mrb[0].mxu0 %v742
        %v859 = vpop.f32.mrb[0].mxu0
        %v860 = vadd.f32 0.0, %v859
        %v861 = vpop.f32.mrb[0].mxu0
        %862 = vmatprep.mubr.f32.mxu0 0.0
        %863 = vmatmul.mubr.f32.gmra.mrb[0].mxu0 %v745
        %v864 = vpop.f32.mrb[0].mxu0
        %v865 = vadd.f32 0.0, %v864
        %v866 = vpop.f32.mrb[0].mxu0
        %867 = vmatprep.mubr.f32.mxu0 0.0
        %868 = vmatmul.mubr.f32.gmra.mrb[0].mxu0 %v748
        %v869 = vpop.f32.mrb[0].mxu0
        %v870 = vadd.f32 0.0, %v869
        %v871 = vpop.f32.mrb[0].mxu0
        %872 = vmatprep.mubr.f32.mxu0 0.0
        %873 = vmatmul.mubr.f32.gmra.mrb[0].mxu0 %v751
        %v874 = vpop.f32.mrb[0].mxu0
        %v875 = vadd.f32 0.0, %v874
        %v876 = vpop.f32.mrb[0].mxu0
        %877 = vmatprep.mubr.f32.mxu0 0.0
        %878 = vmatmul.mubr.f32.gmra.mrb[0].mxu0 %v754
        %v879 = vpop.f32.mrb[0].mxu0
        %v880 = vadd.f32 0.0, %v879
        %v881 = vpop.f32.mrb[0].mxu0
        %882 = vmatprep.mubr.f32.mxu0 0.0
        %883 = vmatmul.mubr.f32.gmra.mrb[0].mxu0 %v757
        %v884 = vpop.f32.mrb[0].mxu0
        %v885 = vadd.f32 0.0, %v884
        %v886 = vpop.f32.mrb[0].mxu0
        %887 = vmatprep.mubr.f32.mxu0 0.0
        %888 = vmatmul.mubr.f32.gmra.mrb[0].mxu0 %v760
        %v889 = vpop.f32.mrb[0].mxu0
        %v890 = vadd.f32 0.0, %v889
        %v891 = vpop.f32.mrb[0].mxu0
        %892 = vmatprep.mubr.f32.mxu0 0.0
        %893 = vmatmul.mubr.f32.gmra.mrb[0].mxu0 %v763
        %v894 = vpop.f32.mrb[0].mxu0
        %v895 = vadd.f32 0.0, %v894
        %v896 = vpop.f32.mrb[0].mxu0
        %897 = vmatprep.mubr.f32.mxu0 0.0
        %898 = vmatmul.mubr.f32.gmra.mrb[0].mxu0 %v766
        %v899 = vpop.f32.mrb[0].mxu0
        %v900 = vadd.f32 0.0, %v899
        %v901 = vpop.f32.mrb[0].mxu0
        %902 = vmatprep.mubr.f32.mxu0 0.0
        %903 = vmatmul.mubr.f32.gmra.mrb[0].mxu0 %v769
        %v904 = vpop.f32.mrb[0].mxu0
        %v905 = vadd.f32 0.0, %v904
        %v906 = vpop.f32.mrb[0].mxu0
        %907 = vmatprep.mubr.f32.mxu0 0.0
        %908 = vmatmul.mubr.f32.gmra.mrb[0].mxu0 %v772
        %v909 = vpop.f32.mrb[0].mxu0
        %v910 = vadd.f32 0.0, %v909
        %v911 = vpop.f32.mrb[0].mxu0
        %912 = vmatprep.mubr.f32.mxu0 0.0
        %913 = vmatmul.mubr.f32.gmra.mrb[0].mxu0 %v775
        %v914 = vpop.f32.mrb[0].mxu0
        %v915 = vadd.f32 0.0, %v914
        %v916 = vpop.f32.mrb[0].mxu0
        %917 = vmatprep.mubr.f32.mxu0 0.0
        %918 = vmatmul.mubr.f32.gmra.mrb[0].mxu0 %v778
        %v919 = vpop.f32.mrb[0].mxu0
        %v920 = vadd.f32 0.0, %v919
        %v921 = vpop.f32.mrb[0].mxu0
        %922 = vmatprep.mubr.f32.mxu0 0.0
        %923 = vmatmul.mubr.f32.gmra.mrb[0].mxu0 %v781
        %v924 = vpop.f32.mrb[0].mxu0
        %v925 = vadd.f32 0.0, %v924
        %v926 = vpop.f32.mrb[0].mxu0
        %927 = vdwg.mxu0
        %v928 = vtanh.pop %v850
        %v929 = vtanh.pop %v855
        %v930 = vtanh.pop %v860
        %v931 = vtanh.pop %v865
        %v932 = vtanh.pop %v870
        %v933 = vtanh.pop %v875
        %v934 = vtanh.pop %v880
        %v935 = vtanh.pop %v885
        %v936 = vtanh.pop %v890
        %v937 = vtanh.pop %v895
        %v938 = vtanh.pop %v900
        %v939 = vtanh.pop %v905
        %v940 = vtanh.pop %v910
        %v941 = vtanh.pop %v915
        %v942 = vtanh.pop %v920
        %v943 = vtanh.pop %v925
        %v944 = vlaneseq
        %v945 = vshrl.u32 %v944, 7
        %v946 = vadd.s32 %v945, 8
        %v947 = vld [vmem:[%s367] sm:$0x1]
        %v948 = vlaneseq
        %v949 = vshrl.u32 %v948, 7
        %v950 = vsub.s32 0, %v949
        %v951 = vrot.slane %v947, %v950
        %vm952 = vcmp.eq.s32.totalorder %v951, %v945
        %vm953 = vcmp.eq.s32.totalorder %v951, %v946
        %v954 = vsel %vm952, 1, 0
        %v955 = vsel %vm953, 1, 0
        %v956 = vcvt.s32.f32 %v954
        %v957 = vcvt.s32.f32 %v955
        %v958 = vld [vmem:[%s370] sm:$0x1]
        %v959 = vlaneseq
        %v960 = vshrl.u32 %v959, 7
        %v961 = vsub.s32 0, %v960
        %v962 = vrot.slane %v958, %v961
        %vm963 = vcmp.eq.s32.totalorder %v962, %v945
        %vm964 = vcmp.eq.s32.totalorder %v962, %v946
        %v965 = vsel %vm963, 1, 0
        %v966 = vsel %vm964, 1, 0
        %v967 = vcvt.s32.f32 %v965
        %v968 = vcvt.s32.f32 %v966
        %v969 = vsub.f32 %v956, %v967
        %v970 = vsub.f32 %v957, %v968
        %v971 = vld [vmem:[#allocation3] sm:$0xff]
        %v972 = vld [vmem:[#allocation3 + $0x8] sm:$0xff]
        %973 = vmatprep.subr.mxu0 0.0
        %974 = vmatpush1.msra.mxu0 %v928
        %975 = vmatprep.subr.mxu0 0.0
        %976 = vmatpush1.msra.mxu0 %v929
        %977 = vmatprep.subr.mxu0 0.0
        %978 = vmatpush1.msra.mxu0 %v930
        %979 = vmatprep.subr.mxu0 0.0
        %980 = vmatpush1.msra.mxu0 %v931
        %981 = vmatprep.subr.mxu0 0.0
        %982 = vmatpush1.msra.mxu0 %v932
        %983 = vmatprep.subr.mxu0 0.0
        %984 = vmatpush1.msra.mxu0 %v933
        %985 = vmatprep.subr.mxu0 0.0
        %986 = vmatpush1.msra.mxu0 %v934
        %987 = vmatprep.subr.mxu0 0.0
        %988 = vmatpush1.msra.mxu0 %v935
        %989 = vmatprep.subr.mxu0 0.0
        %990 = vmatpush1.msra.mxu0 %v936
        %991 = vmatprep.subr.mxu0 0.0
        %992 = vmatpush1.msra.mxu0 %v937
        %993 = vmatprep.subr.mxu0 0.0
        %994 = vmatpush1.msra.mxu0 %v938
        %995 = vmatprep.subr.mxu0 0.0
        %996 = vmatpush1.msra.mxu0 %v939
        %997 = vmatprep.subr.mxu0 0.0
        %998 = vmatpush1.msra.mxu0 %v940
        %999 = vmatprep.subr.mxu0 0.0
        %1000 = vmatpush1.msra.mxu0 %v941
        %1001 = vmatprep.subr.mxu0 0.0
        %1002 = vmatpush1.msra.mxu0 %v942
        %1003 = vmatprep.subr.mxu0 0.0
        %1004 = vmatpush1.msra.mxu0 %v943
        %1005 = vmatprep.subr.mxu0 0.0
        %1006 = vmatpush1.msra.mxu0 0.0
        %1007 = vmatprep.subr.mxu0 0.0
        %1008 = vmatpush1.msra.mxu0 0.0
        %1009 = vmatprep.subr.mxu0 0.0
        %1010 = vmatpush1.msra.mxu0 0.0
        %1011 = vmatprep.subr.mxu0 0.0
        %1012 = vmatpush1.msra.mxu0 0.0
        %1013 = vmatprep.subr.mxu0 0.0
        %1014 = vmatpush1.msra.mxu0 0.0
        %1015 = vmatprep.subr.mxu0 0.0
        %1016 = vmatpush1.msra.mxu0 0.0
        %1017 = vmatprep.subr.mxu0 0.0
        %1018 = vmatpush1.msra.mxu0 0.0
        %1019 = vmatprep.subr.mxu0 0.0
        %1020 = vmatpush1.msra.mxu0 0.0
        %1021 = vmatprep.subr.mxu0 0.0
        %1022 = vmatpush1.msra.mxu0 0.0
        %1023 = vmatprep.subr.mxu0 0.0
        %1024 = vmatpush1.msra.mxu0 0.0
        %1025 = vmatprep.subr.mxu0 0.0
        %1026 = vmatpush1.msra.mxu0 0.0
        %1027 = vmatprep.subr.mxu0 0.0
        %1028 = vmatpush1.msra.mxu0 0.0
        %1029 = vmatprep.subr.mxu0 0.0
        %1030 = vmatpush1.msra.mxu0 0.0
        %1031 = vmatprep.subr.mxu0 0.0
        %1032 = vmatpush1.msra.mxu0 0.0
        %1033 = vmatprep.subr.mxu0 0.0
        %1034 = vmatpush1.msra.mxu0 0.0
        %1035 = vmatprep.subr.mxu0 0.0
        %1036 = vmatpush1.msra.mxu0 0.0
        %1037 = vmatprep.mubr.f32.mxu0 0.0
        %1038 = vmatmul.mubr.f32.gmra.mrb[0].mxu0 %v969
        %v1039 = vpop.f32.mrb[0].mxu0
        %v1040 = vadd.f32 0.0, %v1039
        %v1041 = vpop.f32.mrb[0].mxu0
        %1042 = vmatprep.mubr.f32.mxu0 0.0
        %1043 = vmatmul.mubr.f32.gmra.mrb[0].mxu0 %v970
        %v1044 = vpop.f32.mrb[0].mxu0
        %v1045 = vadd.f32 0.0, %v1044
        %v1046 = vpop.f32.mrb[0].mxu0
        %1047 = vdwg.mxu0
        %v1048 = vadd.f32 %v971, %v1040
        %v1049 = vadd.f32 %v972, %v1045
        %1050 = vst [vmem:[#allocation3] sm:$0xff] %v1048
        %1051 = vst [vmem:[#allocation3 + $0x8] sm:$0xff] %v1049
        %p1052 = scmp.eq.s32.totalorder %s21, 2
        // Predicated region
        $region61: #{tpu_custom_call.1} parent=55 // pred_check
          %p1053 = pneg %p1052
        $region62: #{tpu_custom_call.1} parent=55 // pred_check_branch
          %1055 = sbr.rel (%p1053) target = $region64
        $region63: #{tpu_custom_call.1} parent=55 // pred_region
          %v1056 = vld [vmem:[%s4] sm:$0xff]
          %v1057 = vld [vmem:[%s4 + $0x8] sm:$0xff]
          %v1058 = vld [vmem:[#allocation3] sm:$0xff]
          %v1059 = vld [vmem:[#allocation3 + $0x8] sm:$0xff]
          %1061 = vset.pattern.permute.xlu0 0
          %1062 = vperm.xlu0 %1061, %v1056
          %v1063 = vpop.permute.xlu0 %1062
          %1066 = vset.pattern.permute.xlu0 0
          %1067 = vperm.xlu0 %1066, %v1057
          %v1068 = vpop.permute.xlu0 %1067
          %v1070 = vmul.f32 %v1063, %v1058
          %v1071 = vmul.f32 %v1068, %v1059
          %v1072 = vld [vmem:[%s3] sm:$0xff]
          %v1073 = vld [vmem:[%s3 + $0x8] sm:$0xff]
          %v1074 = vld [vmem:[%s3 + $0x10] sm:$0xff]
          %v1075 = vld [vmem:[%s3 + $0x18] sm:$0xff]
          %v1076 = vld [vmem:[%s3 + $0x20] sm:$0xff]
          %v1077 = vld [vmem:[%s3 + $0x28] sm:$0xff]
          %v1078 = vld [vmem:[%s3 + $0x30] sm:$0xff]
          %v1079 = vld [vmem:[%s3 + $0x38] sm:$0xff]
          %v1080 = vld [vmem:[%s3 + $0x40] sm:$0xff]
          %v1081 = vld [vmem:[%s3 + $0x48] sm:$0xff]
          %v1082 = vld [vmem:[%s3 + $0x50] sm:$0xff]
          %v1083 = vld [vmem:[%s3 + $0x58] sm:$0xff]
          %v1084 = vld [vmem:[%s3 + $0x60] sm:$0xff]
          %v1085 = vld [vmem:[%s3 + $0x68] sm:$0xff]
          %v1086 = vld [vmem:[%s3 + $0x70] sm:$0xff]
          %v1087 = vld [vmem:[%s3 + $0x78] sm:$0xff]
          %1088 = vmatprep.subr.mxu0 0.0
          %1089 = vmatpush1.msra.mxu0 %v1072
          %1090 = vmatprep.subr.mxu0 0.0
          %1091 = vmatpush1.msra.mxu0 %v1073
          %1092 = vmatprep.subr.mxu0 0.0
          %1093 = vmatpush1.msra.mxu0 %v1074
          %1094 = vmatprep.subr.mxu0 0.0
          %1095 = vmatpush1.msra.mxu0 %v1075
          %1096 = vmatprep.subr.mxu0 0.0
          %1097 = vmatpush1.msra.mxu0 %v1076
          %1098 = vmatprep.subr.mxu0 0.0
          %1099 = vmatpush1.msra.mxu0 %v1077
          %1100 = vmatprep.subr.mxu0 0.0
          %1101 = vmatpush1.msra.mxu0 %v1078
          %1102 = vmatprep.subr.mxu0 0.0
          %1103 = vmatpush1.msra.mxu0 %v1079
          %1104 = vmatprep.subr.mxu0 0.0
          %1105 = vmatpush1.msra.mxu0 %v1080
          %1106 = vmatprep.subr.mxu0 0.0
          %1107 = vmatpush1.msra.mxu0 %v1081
          %1108 = vmatprep.subr.mxu0 0.0
          %1109 = vmatpush1.msra.mxu0 %v1082
          %1110 = vmatprep.subr.mxu0 0.0
          %1111 = vmatpush1.msra.mxu0 %v1083
          %1112 = vmatprep.subr.mxu0 0.0
          %1113 = vmatpush1.msra.mxu0 %v1084
          %1114 = vmatprep.subr.mxu0 0.0
          %1115 = vmatpush1.msra.mxu0 %v1085
          %1116 = vmatprep.subr.mxu0 0.0
          %1117 = vmatpush1.msra.mxu0 %v1086
          %1118 = vmatprep.subr.mxu0 0.0
          %1119 = vmatpush1.msra.mxu0 %v1087
          %1120 = vmatprep.subr.mxu0 0.0
          %1121 = vmatpush1.msra.mxu0 0.0
          %1122 = vmatprep.subr.mxu0 0.0
          %1123 = vmatpush1.msra.mxu0 0.0
          %1124 = vmatprep.subr.mxu0 0.0
          %1125 = vmatpush1.msra.mxu0 0.0
          %1126 = vmatprep.subr.mxu0 0.0
          %1127 = vmatpush1.msra.mxu0 0.0
          %1128 = vmatprep.subr.mxu0 0.0
          %1129 = vmatpush1.msra.mxu0 0.0
          %1130 = vmatprep.subr.mxu0 0.0
          %1131 = vmatpush1.msra.mxu0 0.0
          %1132 = vmatprep.subr.mxu0 0.0
          %1133 = vmatpush1.msra.mxu0 0.0
          %1134 = vmatprep.subr.mxu0 0.0
          %1135 = vmatpush1.msra.mxu0 0.0
          %1136 = vmatprep.subr.mxu0 0.0
          %1137 = vmatpush1.msra.mxu0 0.0
          %1138 = vmatprep.subr.mxu0 0.0
          %1139 = vmatpush1.msra.mxu0 0.0
          %1140 = vmatprep.subr.mxu0 0.0
          %1141 = vmatpush1.msra.mxu0 0.0
          %1142 = vmatprep.subr.mxu0 0.0
          %1143 = vmatpush1.msra.mxu0 0.0
          %1144 = vmatprep.subr.mxu0 0.0
          %1145 = vmatpush1.msra.mxu0 0.0
          %1146 = vmatprep.subr.mxu0 0.0
          %1147 = vmatpush1.msra.mxu0 0.0
          %1148 = vmatprep.subr.mxu0 0.0
          %1149 = vmatpush1.msra.mxu0 0.0
          %1150 = vmatprep.subr.mxu0 0.0
          %1151 = vmatpush1.msra.mxu0 0.0
          %1152 = vmatprep.mubr.f32.mxu0 0.0
          %1153 = vmatmul.mubr.f32.gmra.mrb[0].mxu0 %v1070
          %v1154 = vpop.f32.mrb[0].mxu0
          %v1155 = vadd.f32 0.0, %v1154
          %v1156 = vpop.f32.mrb[0].mxu0
          %1157 = vmatprep.mubr.f32.mxu0 0.0
          %1158 = vmatmul.mubr.f32.gmra.mrb[0].mxu0 %v1071
          %v1159 = vpop.f32.mrb[0].mxu0
          %v1160 = vadd.f32 0.0, %v1159
          %v1161 = vpop.f32.mrb[0].mxu0
          %1162 = vdwg.mxu0
          %v1163 = vsub.f32 0.0, %v1155
          %v1164 = vsub.f32 0.0, %v1160
          %v1165 = vmul.f32 %v1163, 0.5
          %v1166 = vmul.f32 %v1164, 0.5
          %v1167 = vld [vmem:[%s0] sm:$0xff]
          %v1168 = vld [vmem:[%s0 + $0x8] sm:$0xff]
          %v1169 = vmul.f32 %v1167, 0.5
          %v1170 = vmul.f32 %v1168, 0.5
          %v1171 = vadd.f32 %v1165, %v1169
          %v1172 = vadd.f32 %v1166, %v1170
          %1173 = vst [vmem:[#allocation4] sm:$0xff] %v1171
          %1174 = vst [vmem:[#allocation4 + $0x8] sm:$0xff] %v1172
        $region64: #{tpu_custom_call.1} parent=55 // pred_fallthru
          _
        // Predicated region
        $region65: #{tpu_custom_call.1} parent=55 // pred_check
          %p1175 = pneg %p243
        $region66: #{tpu_custom_call.1} parent=55 // pred_check_branch
          %1177 = sbr.rel (%p1175) target = $region68
        $region67: #{tpu_custom_call.1} parent=55 // pred_region
          %s1179 = ssub.s32 256, 256
          %1180 = vsyncadd [#allocation5], %s1179
          %s1181 = sshll.u32 [#allocation4], 4
          %s1182 = int_to_ptr.vmem [resolvable:$true] %s1181
          %1187 = dma.vmem_to_hbm [thread:$0]  %s1182, 256, %s9, [#allocation5], 128, 128, 8
        $region68: #{tpu_custom_call.1} parent=55 // pred_fallthru
          _
        // Predicated region
        $region69: #{tpu_custom_call.1} parent=55 // pred_check
          %p1188 = pneg %p243
        $region70: #{tpu_custom_call.1} parent=55 // pred_check_branch
          %1190 = sbr.rel (%p1188) target = $region72
        $region71: #{tpu_custom_call.1} parent=55 // pred_region
          %1191 = dma.done [#allocation5], 256
        $region72: #{tpu_custom_call.1} parent=55 // pred_fallthru
          _
      $region56: #{tpu_custom_call.1} parent=5 // pred_fallthru
        _
      %p1192 = scmp.le.s32.totalorder 2, %s16
      // Predicated region
      $region73: #{tpu_custom_call.1} parent=5 // pred_check
        %p1193 = pneg %p1192
      $region74: #{tpu_custom_call.1} parent=5 // pred_check_branch
        %1195 = sbr.rel (%p1193) target = $region76
      $region75: #{tpu_custom_call.1} parent=5 // pred_region
        %s1196 = ssub.s32 %s16, 2
      $region76: #{tpu_custom_call.1} parent=5 // pred_fallthru
        _
    $region6: #{tpu_custom_call.1} parent=1 // loop_footer
      %s20 = sadd.s32 1, %s16
    $region7: #{tpu_custom_call.1} parent=1 // loop_footer_branch
      %15 = sbr.rel target = $region3
    $region8: #{tpu_custom_call.1} parent=1 // loop_exit
      _
    %1197 = vsyncpa [#allocation5], 1
    %s1198 = scalar_lea.sflag [#allocation5], 1
    %1199 = vsyncpa %s1198, 1

</llo_original>
